<compile_context>
chip_gen: v7x
topology: tpu7x:2x2x1
jax: 0.10.0
libtpu: 0.0.40
codegen_flags: <defaults>
</compile_context>

<pallas_src>
import functools

import jax
import jax.numpy as jnp
from jax import lax
from jax.experimental import pallas as pl
from jax.experimental.pallas import tpu as pltpu


# ----------------------------- helpers -----------------------------

def _tile(dim, pref, align):
    """Largest block <= pref that divides dim and is align-aligned, else full dim."""
    if dim <= pref:
        return dim
    t = (pref // align) * align
    while t >= align:
        if dim % t == 0:
            return t
        t -= align
    return dim  # full-extent block is always legal


def _choose_chunk(T, pref=128):
    """WKV grid chunk length: divides T, <= pref, prefer multiples of 8."""
    if T <= pref:
        return T
    for c in range(pref - pref % 8, 7, -8):
        if T % c == 0:
            return c
    for c in range(pref, 0, -1):
        if T % c == 0:
            return c
    return T


def _choose_subchunk(Lc, pref=32):
    """In-kernel sub-chunk length: divides Lc, <= pref (bounds decay exponents)."""
    if Lc <= pref:
        return Lc
    for s in range(pref, 0, -1):
        if Lc % s == 0:
            return s
    return Lc


def _head_grouping(H, S):
    """Smallest #heads per group whose lane width GH*S is a multiple of 128
    (most head-parallelism), falling back to a single full-width group."""
    for GH in range(1, H + 1):
        if H % GH == 0 and (GH * S) % 128 == 0:
            return GH
    return H


# ----------------------------- matmul kernel -----------------------------

def _matmul_kernel(*refs, activation, has_mul):
    if has_mul:
        x_ref, w_ref, m_ref, o_ref, acc_ref = refs
    else:
        x_ref, w_ref, o_ref, acc_ref = refs
        m_ref = None

    @pl.when(pl.program_id(2) == 0)
    def _():
        acc_ref[...] = jnp.zeros_like(acc_ref)

    acc_ref[...] += jnp.dot(x_ref[...], w_ref[...],
                            preferred_element_type=jnp.float32)

    @pl.when(pl.program_id(2) == pl.num_programs(2) - 1)
    def _():
        acc = acc_ref[...]
        if activation == 'silu':
            acc = acc * jax.nn.sigmoid(acc)
        elif activation == 'sigmoid':
            acc = jax.nn.sigmoid(acc)
        elif activation == 'relu_sq':
            acc = jnp.square(jnp.maximum(acc, 0.0))
        if m_ref is not None:
            acc = acc * m_ref[...].astype(jnp.float32)
        o_ref[...] = acc.astype(o_ref.dtype)


def pallas_linear(x2d, w, activation=None, mul=None, out_dtype=jnp.bfloat16,
                  tm=256, tn=512, tk=512):
    """(M,K) @ (K,N) tiled MXU matmul, bf16 operands, f32 accumulation.

    Optional fused epilogue: activation in {'silu','sigmoid','relu_sq'} and/or
    an elementwise multiply by `mul` (shape (M,N))."""
    M, K = x2d.shape
    K2, N = w.shape
    assert K == K2
    bm = _tile(M, tm, 16)    # bf16 packs two rows per sublane
    bn = _tile(N, tn, 128)
    bk = _tile(K, tk, 128)
    grid = (M // bm, N // bn, K // bk)

    in_specs = [pl.BlockSpec((bm, bk), lambda i, j, k: (i, k)),
                pl.BlockSpec((bk, bn), lambda i, j, k: (k, j))]
    args = [x2d.astype(jnp.bfloat16), w.astype(jnp.bfloat16)]
    if mul is not None:
        in_specs.append(pl.BlockSpec((bm, bn), lambda i, j, k: (i, j)))
        args.append(mul)

    kernel = functools.partial(_matmul_kernel, activation=activation,
                               has_mul=mul is not None)
    return pl.pallas_call(
        kernel,
        grid=grid,
        in_specs=in_specs,
        out_specs=pl.BlockSpec((bm, bn), lambda i, j, k: (i, j)),
        out_shape=jax.ShapeDtypeStruct((M, N), out_dtype),
        scratch_shapes=[pltpu.VMEM((bm, bn), jnp.float32)],
        compiler_params=pltpu.CompilerParams(
            dimension_semantics=("parallel", "parallel", "arbitrary"),
            # working set is a few MiB; 32 MiB fits every generation (v7x incl.)
            vmem_limit_bytes=32 * 1024 * 1024),
    )(*args)


# ----------------------------- layer norm kernel -----------------------------

def _layernorm_kernel(x_ref, g_ref, b_ref, o_ref, *, eps):
    x = x_ref[...].astype(jnp.float32)
    mean = jnp.mean(x, axis=-1, keepdims=True)
    xc = x - mean
    var = jnp.mean(xc * xc, axis=-1, keepdims=True)
    o_ref[...] = (xc * lax.rsqrt(var + eps) * g_ref[...] + b_ref[...]
                  ).astype(o_ref.dtype)


def pallas_layernorm(x2d, g, b, eps=1e-5, bm=256, out_dtype=jnp.bfloat16):
    """Row-tiled LayerNorm; gamma/beta are (1,C); bf16 I/O, f32 math."""
    M, C = x2d.shape
    bm = _tile(M, bm, 8)
    return pl.pallas_call(
        functools.partial(_layernorm_kernel, eps=eps),
        grid=(M // bm,),
        in_specs=[pl.BlockSpec((bm, C), lambda i: (i, 0)),
                  pl.BlockSpec((1, C), lambda i: (0, 0)),
                  pl.BlockSpec((1, C), lambda i: (0, 0))],
        out_specs=pl.BlockSpec((bm, C), lambda i: (i, 0)),
        out_shape=jax.ShapeDtypeStruct((M, C), out_dtype),
        compiler_params=pltpu.CompilerParams(
            dimension_semantics=("parallel",)),
    )(x2d, g.reshape(1, C), b.reshape(1, C))


# ----------------------------- chunked WKV kernel -----------------------------

def _wkv_kernel(x_ref, wq_ref, wki_ref, wkd_ref, wls_ref, u_ref,
                gnw_ref, gnb_ref, s0_ref, o_ref, sT_ref, st_ref,
                *, GH, S, GW, Ls, eps):
    c = pl.program_id(2)

    @pl.when(c == 0)
    def _():
        st_ref[...] = s0_ref[...]        # load initial state for this (batch, group)

    Lc = x_ref.shape[0]
    NS = Lc // Ls
    row = lax.broadcasted_iota(jnp.int32, (Ls, Ls), 0)
    col = lax.broadcasted_iota(jnp.int32, (Ls, Ls), 1)
    strict_lower = row > col             # causal, excludes the diagonal

    for h in range(GH):                  # small, bounded unroll (group size)
        wq = wq_ref[h]                   # (Ls, S)  w^t
        wki = wki_ref[h]                 # (Ls, S)  w^{-(t+1)}  (bounded by Ls)
        wkd = wkd_ref[h]                 # (Ls, S)  w^{Ls-1-t}
        wls = wls_ref[h]                 # (S, 1)   w^{Ls}
        u = u_ref[h]                     # (1, S)   time_faaaa
        gnw = gnw_ref[h]                 # (1, S)
        gnb = gnb_ref[h]
        s = st_ref[h]                    # (S, S)   running state
        off = h * S

        for si in range(NS):             # sub-chunks: MXU-shaped, stable exponents
            r0 = si * Ls
            rs = x_ref[r0:r0 + Ls, off:off + S].astype(jnp.float32)
            ks = x_ref[r0:r0 + Ls, GW + off:GW + off + S].astype(jnp.float32)
            vs = x_ref[r0:r0 + Ls, 2 * GW + off:2 * GW + off + S].astype(jnp.float32)
            gs = x_ref[r0:r0 + Ls, 3 * GW + off:3 * GW + off + S].astype(jnp.float32)

            rq = rs * wq
            # intra-sub-chunk scores on the MXU:
            #   A[t,u] = sum_j r[t,j] k[u,j] w_j^{t-1-u}   (t > u)
            A = lax.dot_general(rq, ks * wki, (((1,), (1,)), ((), ())),
                                preferred_element_type=jnp.float32)   # (Ls, Ls)
            A = jnp.where(strict_lower, A, 0.0)
            # diagonal bonus term: sum_j r[t,j] u_j k[t,j]
            diag = jnp.sum(rs * ks * u, axis=-1, keepdims=True)       # (Ls, 1)

            out = (jnp.dot(A, vs, preferred_element_type=jnp.float32)
                   + diag * vs
                   + jnp.dot(rq, s, preferred_element_type=jnp.float32))

            # state update: s <- w^{Ls} * s + sum_t w^{Ls-1-t} k_t v_t^T
            kv = lax.dot_general(ks * wkd, vs, (((0,), (0,)), ((), ())),
                                 preferred_element_type=jnp.float32)  # (S, S)
            s = s * wls + kv

            # fused GroupNorm(n_head) + SiLU(g) gate, stored into the
            # lane-dense (Lc, GW) output block
            mean = jnp.mean(out, axis=-1, keepdims=True)
            xc = out - mean
            var = jnp.mean(xc * xc, axis=-1, keepdims=True)
            normed = xc * lax.rsqrt(var + eps) * gnw + gnb
            o_ref[r0:r0 + Ls, off:off + S] = (
                normed * gs * jax.nn.sigmoid(gs)).astype(o_ref.dtype)

        st_ref[h] = s

    @pl.when(c == pl.num_programs(2) - 1)
    def _():
        sT_ref[...] = st_ref[...]


def _wkv_decay_tables(time_decay, time_faaaa, Ls):
    """Tiny per-head decay tables for sub-chunk length Ls (exact math)."""
    H, S = time_decay.shape
    logw = -jnp.exp(time_decay.astype(jnp.float32))                   # log(w) <= 0
    t = jnp.arange(Ls, dtype=jnp.float32)
    wq = jnp.exp(logw[:, None, :] * t[None, :, None])                 # (H,Ls,S) w^t
    wki = jnp.exp(-logw[:, None, :] * (t[None, :, None] + 1.0))       # w^{-(t+1)}
    wkd = jnp.exp(logw[:, None, :] * (Ls - 1.0 - t)[None, :, None])   # w^{Ls-1-t}
    wls = jnp.exp(logw * float(Ls)).reshape(H, S, 1)                  # (H,S,1) w^{Ls}
    u = time_faaaa.astype(jnp.float32).reshape(H, 1, S)
    return wq, wki, wkd, wls, u


def pallas_wkv(rkvg, time_decay, time_faaaa, ln_x_w, ln_x_b, s0,
               *, H, S, GH, eps, chunk_pref=128):
    """Chunked RWKV-v5 WKV recurrence with fused GroupNorm + SiLU gate.

    rkvg: (B, T, 4*C) fused projection output, columns laid out head-GROUP
          major as [R|K|V|G] per group (group width GW = GH*S).
    s0:   (B, H, S, S) initial wkv state.
    returns: out (B, T, C) bf16, new state (B, H, S, S) f32.
    """
    B, T, C4 = rkvg.shape
    C = C4 // 4
    GW = GH * S
    HG = H // GH
    Lc = _choose_chunk(T, chunk_pref)
    NC = T // Lc
    Ls = _choose_subchunk(Lc, 32)
    wq, wki, wkd, wls, u = _wkv_decay_tables(time_decay, time_faaaa, Ls)
    gnw = ln_x_w.reshape(H, 1, S).astype(jnp.float32)
    gnb = ln_x_b.reshape(H, 1, S).astype(jnp.float32)

    kernel = functools.partial(_wkv_kernel, GH=GH, S=S, GW=GW, Ls=Ls, eps=eps)
    out, sT = pl.pallas_call(
        kernel,
        grid=(B, HG, NC),
        in_specs=[
            pl.BlockSpec((None, Lc, 4 * GW), lambda b, g, c: (b, c, g)),
            pl.BlockSpec((GH, Ls, S), lambda b, g, c: (g, 0, 0)),
            pl.BlockSpec((GH, Ls, S), lambda b, g, c: (g, 0, 0)),
            pl.BlockSpec((GH, Ls, S), lambda b, g, c: (g, 0, 0)),
            pl.BlockSpec((GH, S, 1), lambda b, g, c: (g, 0, 0)),
            pl.BlockSpec((GH, 1, S), lambda b, g, c: (g, 0, 0)),
            pl.BlockSpec((GH, 1, S), lambda b, g, c: (g, 0, 0)),
            pl.BlockSpec((GH, 1, S), lambda b, g, c: (g, 0, 0)),
            pl.BlockSpec((None, GH, S, S), lambda b, g, c: (b, g, 0, 0)),
        ],
        out_specs=[
            pl.BlockSpec((None, Lc, GW), lambda b, g, c: (b, c, g)),
            pl.BlockSpec((None, GH, S, S), lambda b, g, c: (b, g, 0, 0)),
        ],
        out_shape=[jax.ShapeDtypeStruct((B, T, C), jnp.bfloat16),
                   jax.ShapeDtypeStruct((B, H, S, S), jnp.float32)],
        scratch_shapes=[pltpu.VMEM((GH, S, S), jnp.float32)],
        compiler_params=pltpu.CompilerParams(
            dimension_semantics=("parallel", "parallel", "arbitrary"),
            # explicit budget; fits v7x's 64 MiB/TC as well as v5e/v6e
            vmem_limit_bytes=32 * 1024 * 1024),
    )(rkvg, wq, wki, wkd, wls, u, gnw, gnb, s0.astype(jnp.float32))
    return out, sT


# ----------------------------- weight fusion (init-time) -----------------------------

def _fuse_shift_weight(W, m):
    """xmix @ W == [x | xx] @ fused, where xmix = x*m + xx*(1-m)."""
    return jnp.concatenate([m[:, None] * W, (1.0 - m)[:, None] * W], axis=0)


def _fuse_time_mix_weights(Wr, Wk, Wv, Wg, mr, mk, mv, mg, HG, GW):
    """Fused [x|xx] -> [r,k,v,g] weight with head-GROUP-major column layout:
    for each group g: [R_g (GW) | K_g | V_g | G_g]."""
    C = Wr.shape[0]
    Ws = [_fuse_shift_weight(Wr, mr), _fuse_shift_weight(Wk, mk),
          _fuse_shift_weight(Wv, mv), _fuse_shift_weight(Wg, mg)]
    Ws = [W.reshape(2 * C, HG, GW) for W in Ws]
    return jnp.stack(Ws, axis=2).reshape(2 * C, 4 * C)


# ----------------------------- model glue -----------------------------

def time_mix(p, x, shift_state, wkv_state, n_head, head_size, head_group, gn_eps):
    B, T, C = x.shape
    xx = jnp.concatenate([shift_state[:, None, :], x[:, :-1, :]], axis=1)
    xcat = jnp.concatenate([x, xx], axis=-1).reshape(B * T, 2 * C)
    # single fused projection for r,k,v,g (time-mix folded into the weights)
    rkvg = pallas_linear(xcat, p['W_rkvg']).reshape(B, T, 4 * C)
    out, new_wkv = pallas_wkv(rkvg, p['time_decay'], p['time_faaaa'],
                              p['ln_x_w'], p['ln_x_b'], wkv_state,
                              H=n_head, S=head_size, GH=head_group, eps=gn_eps)
    out = pallas_linear(out.reshape(B * T, C), p['Wo']).reshape(B, T, C)
    return out, (x[:, -1, :], new_wkv)


def channel_mix(p, x, shift_state):
    B, T, C = x.shape
    xx = jnp.concatenate([shift_state[:, None, :], x[:, :-1, :]], axis=1)
    xcat = jnp.concatenate([x, xx], axis=-1).reshape(B * T, 2 * C)
    k = pallas_linear(xcat, p['Wk2'], activation='relu_sq')       # relu(k)^2 fused
    r = pallas_linear(xcat, p['Wr2'], activation='sigmoid')       # sigmoid(r) fused
    out = pallas_linear(k, p['Wv'], mul=r).reshape(B, T, C)       # (k@Wv) * r fused
    return out, x[:, -1, :]


def block_forward(p, x, shift_att, wkv, shift_ffn, layer_id, n_head, head_size,
                  head_group, gn_eps):
    B, T, C = x.shape
    if layer_id == 0:
        x = pallas_layernorm(x.reshape(B * T, C), p['ln0_w'],
                             p['ln0_b']).reshape(B, T, C)
    xn = pallas_layernorm(x.reshape(B * T, C), p['ln1_w'],
                          p['ln1_b']).reshape(B, T, C)
    att_out, (new_shift_att, new_wkv) = time_mix(p['att'], xn, shift_att, wkv,
                                                 n_head, head_size, head_group,
                                                 gn_eps)
    x = x + att_out
    xn = pallas_layernorm(x.reshape(B * T, C), p['ln2_w'],
                          p['ln2_b']).reshape(B, T, C)
    ffn_out, new_shift_ffn = channel_mix(p['ffn'], xn, shift_ffn)
    x = x + ffn_out
    return x, new_shift_att, new_wkv, new_shift_ffn


def rwkv_forward(params, seq, cfg):
    """Mirrors RWKV.forward: seq -> (loss, logits, new_states). dropout=0."""
    C, H, S, L = cfg['n_embd'], cfg['n_head'], cfg['head_size'], cfg['n_layer']
    GH = _head_grouping(H, S)
    gn_eps = 1e-5 * float(cfg.get('head_size_divisor', 8)) ** 2
    idx = seq[:-1][None, :]                                   # (1, T)
    targets = seq[1:][None, :]
    mask = (seq[:-1] != 0).astype(jnp.float32)                # (T,)
    B, T = idx.shape

    x = params['emb'][idx].astype(jnp.bfloat16)               # (B, T, C), XLA gather

    shift_states = jnp.zeros((L, 2, B, C), jnp.bfloat16)
    wkv_states = jnp.zeros((L, B, H, S, S), jnp.float32)
    new_shift, new_wkv = [], []
    for i in range(L):
        x, sa, wk, sf = block_forward(params['blocks'][i], x,
                                      shift_states[i, 0], wkv_states[i],
                                      shift_states[i, 1], i, H, S, GH, gn_eps)
        new_shift.append(jnp.stack([sa, sf], axis=0))
        new_wkv.append(wk)

    x2d = pallas_layernorm(x.reshape(B * T, C), params['ln_out_w'],
                           params['ln_out_b'])
    logits = pallas_linear(x2d, params['head'], out_dtype=jnp.float32)  # (B*T, V)

    # cross entropy with optional mask (same semantics as the torch forward;
    # L2Wrap is identity in the forward direction)
    logp = jax.nn.log_softmax(logits, axis=-1)
    tgt = targets.reshape(-1)
    nll = -jnp.take_along_axis(logp, tgt[:, None], axis=-1)[:, 0]
    sum_mask = jnp.sum(mask)
    loss = jnp.sum(nll * mask)
    loss = jnp.where(sum_mask > 0, loss / jnp.maximum(sum_mask, 1.0), loss)

    new_states = (jnp.stack(new_shift, axis=0),               # (L, 2, B, C)
                  jnp.stack(new_wkv, axis=0))                 # (L, B, H, S, S)
    return loss, logits.reshape(B, T, -1), new_states


# ----------------------------- init -----------------------------

def init_params(key, cfg):
    V, C, L = cfg['vocab_size'], cfg['n_embd'], cfg['n_layer']
    H, S, F = cfg['n_head'], cfg['head_size'], cfg['dim_ffn']
    GH = _head_grouping(H, S)
    HG, GW = H // GH, GH * S
    keys = iter(jax.random.split(key, 1024))

    def nrm(shape, scale=0.02):
        return scale * jax.random.normal(next(keys), shape, jnp.float32)

    def uni(shape):
        return jax.random.uniform(next(keys), shape, dtype=jnp.float32)

    params = {
        'emb': nrm((V, C), 0.1),
        'ln_out_w': jnp.ones((C,), jnp.float32),
        'ln_out_b': jnp.zeros((C,), jnp.float32),
        'head': nrm((C, V)).astype(jnp.bfloat16),
        'blocks': [],
    }
    for i in range(L):
        # base (PyTorch-style) weights; time-mix coefficients folded in at init
        mr, mk, mv, mg = uni((C,)), uni((C,)), uni((C,)), uni((C,))
        Wr, Wk, Wv, Wg = nrm((C, C)), nrm((C, C)), nrm((C, C)), nrm((C, C))
        att = {
            'time_decay': -5.0 + 3.0 * uni((H, S)),
            'time_faaaa': 0.5 * uni((H, S)),
            'W_rkvg': _fuse_time_mix_weights(Wr, Wk, Wv, Wg, mr, mk, mv, mg,
                                             HG, GW).astype(jnp.bfloat16),
            'Wo': nrm((C, C)).astype(jnp.bfloat16),
            'ln_x_w': jnp.ones((C,), jnp.float32),
            'ln_x_b': jnp.zeros((C,), jnp.float32),
        }
        fmk, fmr = uni((C,)), uni((C,))
        fWk, fWr = nrm((C, F)), nrm((C, C))
        ffn = {
            'Wk2': _fuse_shift_weight(fWk, fmk).astype(jnp.bfloat16),
            'Wr2': _fuse_shift_weight(fWr, fmr).astype(jnp.bfloat16),
            'Wv': nrm((F, C)).astype(jnp.bfloat16),
        }
        blk = {
            'ln1_w': jnp.ones((C,), jnp.float32),
            'ln1_b': jnp.zeros((C,), jnp.float32),
            'ln2_w': jnp.ones((C,), jnp.float32),
            'ln2_b': jnp.zeros((C,), jnp.float32),
            'att': att, 'ffn': ffn,
        }
        if i == 0:
            blk['ln0_w'] = jnp.ones((C,), jnp.float32)
            blk['ln0_b'] = jnp.zeros((C,), jnp.float32)
        params['blocks'].append(blk)
    return params


# ----------------------------- main -----------------------------

if __name__ == "__main__":
    cfg = dict(vocab_size=128, n_embd=64, head_size=16, n_layer=2,
               head_size_divisor=8)
    cfg['n_head'] = cfg['n_embd'] // cfg['head_size']              # 4
    cfg['dim_ffn'] = int(cfg['n_embd'] * 3.5 // 32 * 32)           # 224

    key = jax.random.PRNGKey(0)
    pkey, skey = jax.random.split(key)
    params = init_params(pkey, cfg)
    # sequence of 9 tokens -> idx length T=8, batch B=1 (as in RWKV.forward)
    seq = jax.random.randint(skey, (9,), 1, cfg['vocab_size'])

    loss, logits, new_states = rwkv_forward(params, seq, cfg)
    jax.block_until_ready((loss, logits, new_states))
    print("KERNEL_OK")
</pallas_src>

<mosaic_0001>
module attributes {stable_mosaic.version = 11 : i64} {
  func.func @_layernorm_kernel(%arg0: i32, %arg1: memref<8x64xbf16, #tpu.memory_space<vmem>>, %arg2: memref<1x64xf32, #tpu.memory_space<vmem>>, %arg3: memref<1x64xf32, #tpu.memory_space<vmem>>, %arg4: memref<8x64xbf16, #tpu.memory_space<vmem>>) attributes {dimension_semantics = [#tpu.dimension_semantics<parallel>], iteration_bounds = array<i64: 1>, scalar_prefetch = 0 : i64, scratch_operands = 0 : i64, tpu.core_type = #tpu.core_type<tc>, window_params = [{transform_indices = @transform_0, window_bounds = array<i64: 8, 64>}, {pipeline_mode = #tpu.pipeline_mode<synchronous>, transform_indices = @transform_1, window_bounds = array<i64: 1, 64>}, {pipeline_mode = #tpu.pipeline_mode<synchronous>, transform_indices = @transform_2, window_bounds = array<i64: 1, 64>}, {transform_indices = @transform_3, window_bounds = array<i64: 8, 64>}]} {
    %c0 = arith.constant 0 : index
    %c0_0 = arith.constant 0 : index
    %0 = vector.load %arg1[%c0, %c0_0] : memref<8x64xbf16, #tpu.memory_space<vmem>>, vector<8x64xbf16>
    %1 = arith.extf %0 : vector<8x64xbf16> to vector<8x64xf32>
    %cst = arith.constant dense<0.000000e+00> : vector<8xf32>
    %2 = vector.multi_reduction <add>, %1, %cst [1] : vector<8x64xf32> to vector<8xf32>
    %3 = vector.shape_cast %2 : vector<8xf32> to vector<8x1xf32>
    %cst_1 = arith.constant 6.400000e+01 : f32
    %4 = vector.broadcast %cst_1 : f32 to vector<8x1xf32>
    %5 = arith.divf %3, %4 : vector<8x1xf32>
    %6 = vector.broadcast %5 : vector<8x1xf32> to vector<8x64xf32>
    %7 = arith.subf %1, %6 : vector<8x64xf32>
    %8 = arith.mulf %7, %7 : vector<8x64xf32>
    %cst_2 = arith.constant dense<0.000000e+00> : vector<8xf32>
    %9 = vector.multi_reduction <add>, %8, %cst_2 [1] : vector<8x64xf32> to vector<8xf32>
    %10 = vector.shape_cast %9 : vector<8xf32> to vector<8x1xf32>
    %cst_3 = arith.constant 6.400000e+01 : f32
    %11 = vector.broadcast %cst_3 : f32 to vector<8x1xf32>
    %12 = arith.divf %10, %11 : vector<8x1xf32>
    %cst_4 = arith.constant 9.99999974E-6 : f32
    %13 = vector.broadcast %cst_4 : f32 to vector<8x1xf32>
    %14 = arith.addf %12, %13 : vector<8x1xf32>
    %15 = math.rsqrt %14 : vector<8x1xf32>
    %16 = vector.broadcast %15 : vector<8x1xf32> to vector<8x64xf32>
    %17 = arith.mulf %7, %16 : vector<8x64xf32>
    %c0_5 = arith.constant 0 : index
    %c0_6 = arith.constant 0 : index
    %18 = vector.load %arg2[%c0_5, %c0_6] : memref<1x64xf32, #tpu.memory_space<vmem>>, vector<1x64xf32>
    %19 = vector.broadcast %18 : vector<1x64xf32> to vector<8x64xf32>
    %20 = arith.mulf %17, %19 : vector<8x64xf32>
    %c0_7 = arith.constant 0 : index
    %c0_8 = arith.constant 0 : index
    %21 = vector.load %arg3[%c0_7, %c0_8] : memref<1x64xf32, #tpu.memory_space<vmem>>, vector<1x64xf32>
    %22 = vector.broadcast %21 : vector<1x64xf32> to vector<8x64xf32>
    %23 = arith.addf %20, %22 : vector<8x64xf32>
    %24 = arith.truncf %23 : vector<8x64xf32> to vector<8x64xbf16>
    %c0_9 = arith.constant 0 : index
    %c0_10 = arith.constant 0 : index
    %25 = vector.load %arg4[%c0_9, %c0_10] : memref<8x64xbf16, #tpu.memory_space<vmem>>, vector<8x64xbf16>
    tpu.vector_store %arg4[%c0_9, %c0_10], %24 {strides = array<i32>} : memref<8x64xbf16, #tpu.memory_space<vmem>>, vector<8x64xbf16>,
    return
  }
  func.func @transform_0(%arg0: i32) -> (i32, i32) {
    %c0_i32 = arith.constant 0 : i32
    %c0_i32_0 = arith.constant 0 : i32
    return %arg0, %c0_i32 : i32, i32
  }
  func.func @transform_1(%arg0: i32) -> (i32, i32) {
    %c0_i32 = arith.constant 0 : i32
    %c0_i32_0 = arith.constant 0 : i32
    %c0_i32_1 = arith.constant 0 : i32
    return %c0_i32, %c0_i32_0 : i32, i32
  }
  func.func @transform_2(%arg0: i32) -> (i32, i32) {
    %c0_i32 = arith.constant 0 : i32
    %c0_i32_0 = arith.constant 0 : i32
    %c0_i32_1 = arith.constant 0 : i32
    return %c0_i32, %c0_i32_0 : i32, i32
  }
  func.func @transform_3(%arg0: i32) -> (i32, i32) {
    %c0_i32 = arith.constant 0 : i32
    %c0_i32_0 = arith.constant 0 : i32
    return %arg0, %c0_i32 : i32, i32
  }
}

</mosaic_0001>

<llo_original>
// kernel: tpu_custom_call.1
$region0: #{tpu_custom_call.1}
  #allocation0 [shape = 'u32[]', space=smem, size = 0x4, offset = 0x4, fixed_abs, tag = 'smem constant byte address 0x4 - core index']
  #allocation1 [shape = 'u32[144,128]{1,0:T(1,128)}', space=vmem, size = 0x12000, scoped, tag = 'internal scratch']
  %s0 = inlined_call_operand.hbm [shape: bf16[8,64], index: 0, kind: input, shape index: {}]
  %s1 = inlined_call_operand.vmem [shape: f32[1,64], index: 1, kind: input, shape index: {}]
  %s2 = inlined_call_operand.vmem [shape: f32[1,64], index: 2, kind: input, shape index: {}]
  %s3 = inlined_call_operand.hbm [shape: bf16[8,64], index: 3, kind: output, shape index: {}]
  %s4 = sld [smem:[#allocation0]]
  $region26: #{tpu_custom_call.1} parent=0
    _
  %s6 = ssub.s32 1, %s4
  %s7 = scalar_select 0, %s6, %s4
  $region1: #{tpu_custom_call.1} parent=0
    #allocation2 [shape = 'u8[2048]{0}', space=vmem, size = 0x800, scoped, tag = 'input window, operand 0, single buffered']
    #allocation3 [shape = 's32[1]{0}', space=sflag, size = 0x4, scoped, tag = 'scoped memory for tpu_custom_call.1']
    #allocation4 [shape = 's32[1]{0}', space=sflag, size = 0x4, scoped, tag = 'scoped memory for tpu_custom_call.1']
    #allocation5 [shape = 'u8[2048]{0}', space=vmem, size = 0x800, scoped, tag = 'output window, operand 0, single buffered']
    %8 = vsyncpa [#allocation3], 0
    %9 = vsyncpa [#allocation4], 0
    // Predicated region
    $region2: #{tpu_custom_call.1} parent=1 // pred_check
      _
    $region3: #{tpu_custom_call.1} parent=1 // pred_check_branch
      %11 = sbr.rel (0) target = $region5
    $region4: #{tpu_custom_call.1} parent=1 // pred_region
      %s13 = ssub.s32 64, 64
      %14 = vsyncadd [#allocation3], %s13
      %s16 = sshll.u32 [#allocation2], 4
      %s17 = int_to_ptr.vmem [resolvable:$true] %s16
      %19 = dma.hbm_to_vmem [thread:$0]  %s0, 64, %s17, [#allocation3]
    $region5: #{tpu_custom_call.1} parent=1 // pred_fallthru
      _
    // Predicated region
    $region6: #{tpu_custom_call.1} parent=1 // pred_check
      _
    $region7: #{tpu_custom_call.1} parent=1 // pred_check_branch
      %21 = sbr.rel (0) target = $region9
    $region8: #{tpu_custom_call.1} parent=1 // pred_region
      _
    $region9: #{tpu_custom_call.1} parent=1 // pred_fallthru
      _
    // Predicated region
    $region10: #{tpu_custom_call.1} parent=1 // pred_check
      _
    $region11: #{tpu_custom_call.1} parent=1 // pred_check_branch
      %23 = sbr.rel (0) target = $region13
    $region12: #{tpu_custom_call.1} parent=1 // pred_region
      _
    $region13: #{tpu_custom_call.1} parent=1 // pred_fallthru
      _
    // Predicated region
    $region14: #{tpu_custom_call.1} parent=1 // pred_check
      _
    $region15: #{tpu_custom_call.1} parent=1 // pred_check_branch
      %25 = sbr.rel (0) target = $region17
    $region16: #{tpu_custom_call.1} parent=1 // pred_region
      %26 = dma.done [#allocation3], 64
    $region17: #{tpu_custom_call.1} parent=1 // pred_fallthru
      _
    %v27 = vld [vmem:[#allocation2] sm:$0xf]
    %v28 = vunpack.c.l.bf16 %v27
    %vm29 = vcmask 523264
    %v30 = vsel %vm29, %v28, 0.0
    %31 = vadd.xlane.f32.xlu0 %v30
    %v32 = vpop.xlane.xlu0 %31
    %v33 = vrcp.pop 64.0
    %v34 = vmul.f32 %v32, %v33
    %v35 = vsub.f32 %v28, %v34
    %v36 = vmul.f32 %v35, %v35
    %v37 = vsel %vm29, %v36, 0.0
    %38 = vadd.xlane.f32.xlu0 %v37
    %v39 = vpop.xlane.xlu0 %38
    %v40 = vmul.f32 %v39, %v33
    %v41 = vadd.f32 %v40, 1e-05
    %v42 = vrsqrt.pop %v41
    %v43 = vmul.f32 %v35, %v42
    %v44 = vld [vmem:[%s1] sm:$0x1]
    %v46 = vlaneseq
    %v47 = vshrl.u32 %v46, 7
    %v48 = vsub.s32 0, %v47
    %v49 = vrot.slane %v44, %v48
    %v51 = vmul.f32 %v43, %v49
    %v52 = vld [vmem:[%s2] sm:$0x1]
    %v54 = vlaneseq
    %v55 = vshrl.u32 %v54, 7
    %v56 = vsub.s32 0, %v55
    %v57 = vrot.slane %v52, %v56
    %v59 = vadd.f32 %v51, %v57
    %v60 = vpack.c.bf16 %v59, %v59
    %vm61 = vcmask 519168
    %62 = vst.msk [vmem:[#allocation5] sm:$0xf] %vm61, %v60
    // Predicated region
    $region18: #{tpu_custom_call.1} parent=1 // pred_check
      _
    $region19: #{tpu_custom_call.1} parent=1 // pred_check_branch
      %64 = sbr.rel (0) target = $region21
    $region20: #{tpu_custom_call.1} parent=1 // pred_region
      %s66 = ssub.s32 64, 64
      %67 = vsyncadd [#allocation4], %s66
      %s69 = sshll.u32 [#allocation5], 4
      %s70 = int_to_ptr.vmem [resolvable:$true] %s69
      %72 = dma.vmem_to_hbm [thread:$0]  %s70, 64, %s3, [#allocation4]
    $region21: #{tpu_custom_call.1} parent=1 // pred_fallthru
      _
    // Predicated region
    $region22: #{tpu_custom_call.1} parent=1 // pred_check
      _
    $region23: #{tpu_custom_call.1} parent=1 // pred_check_branch
      %74 = sbr.rel (0) target = $region25
    $region24: #{tpu_custom_call.1} parent=1 // pred_region
      %75 = dma.done [#allocation4], 64
    $region25: #{tpu_custom_call.1} parent=1 // pred_fallthru
      _
    %76 = vsyncpa [#allocation3], 1
    %77 = vsyncpa [#allocation4], 1

</llo_original>
